<compile_context>
chip_gen: v6e
topology: v6e:2x2x1
jax: 0.10.0
libtpu: 0.0.40
codegen_flags: <defaults>
</compile_context>

<pallas_src>
import functools

import jax
import jax.numpy as jnp
import numpy as np
from jax import lax
from jax.experimental import pallas as pl
from jax.experimental.pallas import tpu as pltpu


def preprocess_params(params, enc_dim, dec_dim):
    """Pack all weights into one VMEM slab (+ one SMEM scalar). Done once."""
    w_u, b_u, v_w, v_b = params["w_u"], params["b_u"], params["v_w"], params["v_b"]
    epd = enc_dim + dec_dim
    # Slab layout (row starts kept sublane-aligned so kernel slices stay aligned):
    #   rows [0      : epd  ) : W_U^T   [E+D, D]
    #   row   epd             : b_U     [D]
    #   row   epd + 8         : v       [D]   (V weight as a lane row)
    n_rows = epd + 16
    slab = jnp.zeros((n_rows, dec_dim), jnp.float32)
    slab = slab.at[0:epd, :].set(jnp.transpose(w_u).astype(jnp.float32))
    slab = slab.at[epd, :].set(b_u.astype(jnp.float32))
    slab = slab.at[epd + 8, :].set(v_w.reshape(dec_dim).astype(jnp.float32))
    return {
        "slab": slab,
        "v_b": v_b.reshape(1).astype(jnp.float32),   # SMEM scalar
        "enc_dim": enc_dim,
        "dec_dim": dec_dim,
    }


def _attention_kernel(cat_ref, slab_ref, vb_ref, c_ref, *, G, L, E, D):
    # cat_ref:  (G*L, E+D) VMEM   slab_ref: (E+D+16, D) VMEM
    # vb_ref:   (1,) SMEM         c_ref:    (G, E) VMEM
    epd = E + D
    GL = G * L

    cat = cat_ref[...]                                   # [GL, E+D]
    w = slab_ref[0:epd, :]                               # [E+D, D]
    b = slab_ref[epd:epd + 1, :]                         # [1, D]
    v = slab_ref[epd + 8:epd + 9, :]                     # [1, D]

    # (1) ONE fused MXU pass: encoder + decoder projection together.
    h = jnp.tanh(jnp.dot(cat, w, preferred_element_type=jnp.float32) + b)   # [GL, D]

    # (2) Scores. v is a single row, so a lane reduce (XLU) beats a 1-lane MXU
    #     matmul at D=32.  V bias comes from the SMEM scalar (softmax-shift
    #     invariant, kept for fidelity).
    sc = jnp.sum(h * v, axis=-1, keepdims=True) + vb_ref[0]                 # [GL, 1]

    # (3) Segment matrices built in-register from iota (no HBM traffic).
    #     A "group" is one (decode step, batch) pair; flat row j belongs to
    #     group j // L.
    rb = lax.broadcasted_iota(jnp.int32, (G, GL), 0)
    cb = lax.broadcasted_iota(jnp.int32, (G, GL), 1)
    seg = ((cb >= rb * L) & (cb < (rb + 1) * L)).astype(jnp.float32)        # [G, GL]
    rt = lax.broadcasted_iota(jnp.int32, (GL, G), 0)
    ct = lax.broadcasted_iota(jnp.int32, (GL, G), 1)
    segT_b = (rt >= ct * L) & (rt < (ct + 1) * L)                           # [GL, G]
    segT = segT_b.astype(jnp.float32)

    # (4) Per-group softmax max (numerically safe even when groups' score
    #     ranges diverge, unlike the previous global shift).
    masked = jnp.where(segT_b, sc, -1e30)                                   # [GL, G]
    m_row = jnp.max(masked, axis=0, keepdims=True)                          # [1, G]
    m_flat = jnp.sum(segT * m_row, axis=-1, keepdims=True)                  # [GL, 1]

    p = jnp.exp(sc - m_flat)                                                # [GL, 1]
    den = jnp.dot(seg, p, preferred_element_type=jnp.float32)               # [G, 1]

    # (5) Context = segment-sum of p-weighted encoder rows (MXU), normalized
    #     once with an exact reciprocal (perf review correctness concern #2).
    enc_rows = cat[:, 0:E]                                                  # [GL, E]
    c_un = jnp.dot(seg, p * enc_rows, preferred_element_type=jnp.float32)   # [G, E]
    c_ref[...] = (c_un / den).astype(c_ref.dtype)


def _run_kernel(cat_flat, prepared, G, L):
    E, D = prepared["enc_dim"], prepared["dec_dim"]
    kernel = functools.partial(_attention_kernel, G=G, L=L, E=E, D=D)
    return pl.pallas_call(
        kernel,
        out_shape=jax.ShapeDtypeStruct((G, E), jnp.float32),
        in_specs=[
            pl.BlockSpec(memory_space=pltpu.MemorySpace.VMEM),   # fused activations
            pl.BlockSpec(memory_space=pltpu.MemorySpace.VMEM),   # packed param slab
            pl.BlockSpec(memory_space=pltpu.MemorySpace.SMEM),   # v_b scalar
        ],
        out_specs=pl.BlockSpec(memory_space=pltpu.MemorySpace.VMEM),
    )(cat_flat, prepared["slab"], prepared["v_b"])


def bahdanau_attention_multistep(enc_outs, s_prev_steps, prepared):
    """T decode steps in one pallas_call (amortizes the fixed call overhead).

    enc_outs: [B, L, E]; s_prev_steps: [T, 1, B, D] -> [T, B, 1, E].
    """
    B, L, E = enc_outs.shape
    T = s_prev_steps.shape[0]
    D = prepared["dec_dim"]
    s3 = s_prev_steps.reshape(T, B, D)
    # Fused concat built in the wrapper (free layout plumbing outside kernel).
    # TODO(synk): at large L/T share the encoder projection across steps instead
    # of replicating enc rows into every step's cat slab.
    cat = jnp.concatenate(
        [jnp.broadcast_to(enc_outs[None, :, :, :], (T, B, L, E)),
         jnp.broadcast_to(s3[:, :, None, :], (T, B, L, D))],
        axis=-1,
    ).reshape(T * B * L, E + D)
    out = _run_kernel(cat, prepared, G=T * B, L=L)       # [T*B, E]
    return out.reshape(T, B, 1, E)


def bahdanau_attention(enc_outs, s_prev, prepared):
    """Single decode step, matching the PyTorch module.

    enc_outs: [B, L, E]; s_prev: [1, B, D] -> c_t: [B, 1, E].
    """
    return bahdanau_attention_multistep(enc_outs, s_prev[None], prepared)[0]


def reference(enc_outs, s_prev, params):
    """Pure-JAX replica of the PyTorch forward for verification."""
    B, L, E = enc_outs.shape
    D = s_prev.shape[-1]
    s_expanded = jnp.broadcast_to(jnp.transpose(s_prev, (1, 0, 2)), (B, L, D))
    cat = jnp.concatenate([enc_outs, s_expanded], axis=-1)            # [B, L, E+D]
    h = jnp.tanh(cat @ params["w_u"].T + params["b_u"])               # [B, L, D]
    alpha = h @ params["v_w"].T + params["v_b"]                       # [B, L, 1]
    alpha = jnp.transpose(alpha, (0, 2, 1))                           # [B, 1, L]
    e = jax.nn.softmax(alpha, axis=-1)
    return jnp.einsum("bql,ble->bqe", e, enc_outs)                    # [B, 1, E]


if __name__ == "__main__":
    B, L, ENC_DIM, DEC_DIM, T = 2, 8, 32, 32, 4

    key = jax.random.PRNGKey(0)
    k_enc, k_s, k_wu, k_bu, k_vw, k_vb = jax.random.split(key, 6)

    enc_outs = jax.random.normal(k_enc, (B, L, ENC_DIM), dtype=jnp.float32)
    s_steps = jax.random.normal(k_s, (T, 1, B, DEC_DIM), dtype=jnp.float32)

    # Deterministic parameter init (shapes match nn.Linear: weight [out, in]).
    params = {
        "w_u": jax.random.normal(k_wu, (DEC_DIM, ENC_DIM + DEC_DIM), dtype=jnp.float32) * 0.1,
        "b_u": jax.random.normal(k_bu, (DEC_DIM,), dtype=jnp.float32) * 0.1,
        "v_w": jax.random.normal(k_vw, (1, DEC_DIM), dtype=jnp.float32) * 0.1,
        "v_b": jax.random.normal(k_vb, (1,), dtype=jnp.float32) * 0.1,
    }

    prepared = preprocess_params(params, ENC_DIM, DEC_DIM)

    # 1) Single decode step (module-faithful call).
    c_single = jax.block_until_ready(bahdanau_attention(enc_outs, s_steps[0], prepared))
    r_single = jax.block_until_ready(reference(enc_outs, s_steps[0], params))
    np.testing.assert_allclose(np.asarray(c_single), np.asarray(r_single),
                               rtol=1e-4, atol=1e-4)

    # 2) T decode steps amortized over ONE pallas_call (perf-review item 3).
    c_multi = jax.block_until_ready(
        bahdanau_attention_multistep(enc_outs, s_steps, prepared))
    r_multi = jnp.stack([reference(enc_outs, s_steps[t], params) for t in range(T)])
    np.testing.assert_allclose(np.asarray(c_multi), np.asarray(r_multi),
                               rtol=1e-4, atol=1e-4)

    print("KERNEL_OK")
</pallas_src>

<mosaic_0001>
module attributes {stable_mosaic.version = 11 : i64} {
  func.func @_attention_kernel(%arg0: memref<16x64xf32, #tpu.memory_space<vmem>>, %arg1: memref<80x32xf32, #tpu.memory_space<vmem>>, %arg2: memref<1xf32, #tpu.memory_space<smem>>, %arg3: memref<2x32xf32, #tpu.memory_space<vmem>>) attributes {dimension_semantics = [], scalar_prefetch = 0 : i64, scratch_operands = 0 : i64, tpu.core_type = #tpu.core_type<tc>} {
    %c0 = arith.constant 0 : index
    %c0_0 = arith.constant 0 : index
    %0 = vector.load %arg0[%c0, %c0_0] : memref<16x64xf32, #tpu.memory_space<vmem>>, vector<16x64xf32>
    %c0_1 = arith.constant 0 : index
    %c0_2 = arith.constant 0 : index
    %1 = vector.load %arg1[%c0_1, %c0_2] : memref<80x32xf32, #tpu.memory_space<vmem>>, vector<64x32xf32>
    %c64 = arith.constant 64 : index
    %c0_3 = arith.constant 0 : index
    %2 = vector.load %arg1[%c64, %c0_3] : memref<80x32xf32, #tpu.memory_space<vmem>>, vector<1x32xf32>
    %c72 = arith.constant 72 : index
    %c0_4 = arith.constant 0 : index
    %3 = vector.load %arg1[%c72, %c0_4] : memref<80x32xf32, #tpu.memory_space<vmem>>, vector<1x32xf32>
    %cst = arith.constant dense<0.000000e+00> : vector<16x32xf32>
    %4 = tpu.matmul %0, %1, %cst {dimension_numbers = #tpu.dot_dimension_numbers<[1], [0], [0], [1], [0, 0, 1, 1], [], []>} : vector<16x64xf32>, vector<64x32xf32>, vector<16x32xf32> -> vector<16x32xf32>
    %5 = vector.broadcast %2 : vector<1x32xf32> to vector<16x32xf32>
    %6 = arith.addf %4, %5 : vector<16x32xf32>
    %7 = math.tanh %6 : vector<16x32xf32>
    %8 = vector.broadcast %3 : vector<1x32xf32> to vector<16x32xf32>
    %9 = arith.mulf %7, %8 : vector<16x32xf32>
    %cst_5 = arith.constant dense<0.000000e+00> : vector<16xf32>
    %10 = vector.multi_reduction <add>, %9, %cst_5 [1] : vector<16x32xf32> to vector<16xf32>
    %11 = vector.shape_cast %10 : vector<16xf32> to vector<16x1xf32>
    %c0_6 = arith.constant 0 : index
    %12 = memref.load %arg2[%c0_6] : memref<1xf32, #tpu.memory_space<smem>>
    %13 = vector.broadcast %12 : f32 to vector<16x1xf32>
    %14 = arith.addf %11, %13 : vector<16x1xf32>
    %15 = tpu.iota {dimensions = array<i32: 0>} : vector<2x16xi32>
    %16 = tpu.iota {dimensions = array<i32: 1>} : vector<2x16xi32>
    %c8_i32 = arith.constant 8 : i32
    %17 = vector.broadcast %c8_i32 : i32 to vector<2x16xi32>
    %18 = arith.muli %15, %17 : vector<2x16xi32>
    %19 = arith.cmpi sge, %16, %18 : vector<2x16xi32>
    %c1_i32 = arith.constant 1 : i32
    %20 = vector.broadcast %c1_i32 : i32 to vector<2x16xi32>
    %21 = arith.addi %15, %20 : vector<2x16xi32>
    %c8_i32_7 = arith.constant 8 : i32
    %22 = vector.broadcast %c8_i32_7 : i32 to vector<2x16xi32>
    %23 = arith.muli %21, %22 : vector<2x16xi32>
    %24 = arith.cmpi slt, %16, %23 : vector<2x16xi32>
    %25 = arith.andi %19, %24 : vector<2x16xi1>
    %26 = arith.extui %25 : vector<2x16xi1> to vector<2x16xi32>
    %27 = arith.sitofp %26 : vector<2x16xi32> to vector<2x16xf32>
    %28 = tpu.iota {dimensions = array<i32: 0>} : vector<16x2xi32>
    %29 = tpu.iota {dimensions = array<i32: 1>} : vector<16x2xi32>
    %c8_i32_8 = arith.constant 8 : i32
    %30 = vector.broadcast %c8_i32_8 : i32 to vector<16x2xi32>
    %31 = arith.muli %29, %30 : vector<16x2xi32>
    %32 = arith.cmpi sge, %28, %31 : vector<16x2xi32>
    %c1_i32_9 = arith.constant 1 : i32
    %33 = vector.broadcast %c1_i32_9 : i32 to vector<16x2xi32>
    %34 = arith.addi %29, %33 : vector<16x2xi32>
    %c8_i32_10 = arith.constant 8 : i32
    %35 = vector.broadcast %c8_i32_10 : i32 to vector<16x2xi32>
    %36 = arith.muli %34, %35 : vector<16x2xi32>
    %37 = arith.cmpi slt, %28, %36 : vector<16x2xi32>
    %38 = arith.andi %32, %37 : vector<16x2xi1>
    %39 = arith.extui %38 : vector<16x2xi1> to vector<16x2xi32>
    %40 = arith.sitofp %39 : vector<16x2xi32> to vector<16x2xf32>
    %cst_11 = arith.constant -1.000000e+30 : f32
    %41 = vector.shape_cast %14 : vector<16x1xf32> to vector<16x1xf32>
    %42 = vector.broadcast %41 : vector<16x1xf32> to vector<16x2xf32>
    %43 = vector.broadcast %cst_11 : f32 to vector<16x2xf32>
    %44 = arith.select %38, %42, %43 : vector<16x2xi1>, vector<16x2xf32>
    %cst_12 = arith.constant dense<0xFF800000> : vector<2xf32>
    %45 = vector.multi_reduction <maximumf>, %44, %cst_12 [0] : vector<16x2xf32> to vector<2xf32>
    %46 = vector.shape_cast %45 : vector<2xf32> to vector<1x2xf32>
    %47 = vector.broadcast %46 : vector<1x2xf32> to vector<16x2xf32>
    %48 = arith.mulf %40, %47 : vector<16x2xf32>
    %cst_13 = arith.constant dense<0.000000e+00> : vector<16xf32>
    %49 = vector.multi_reduction <add>, %48, %cst_13 [1] : vector<16x2xf32> to vector<16xf32>
    %50 = vector.shape_cast %49 : vector<16xf32> to vector<16x1xf32>
    %51 = arith.subf %14, %50 : vector<16x1xf32>
    %52 = math.exp %51 : vector<16x1xf32>
    %cst_14 = arith.constant dense<0.000000e+00> : vector<2x1xf32>
    %53 = tpu.matmul %27, %52, %cst_14 {dimension_numbers = #tpu.dot_dimension_numbers<[1], [0], [0], [1], [0, 0, 1, 1], [], []>} : vector<2x16xf32>, vector<16x1xf32>, vector<2x1xf32> -> vector<2x1xf32>
    %54 = vector.extract_strided_slice %0 {offsets = [0, 0], sizes = [16, 32], strides = [1, 1]} : vector<16x64xf32> to vector<16x32xf32>
    %55 = vector.broadcast %52 : vector<16x1xf32> to vector<16x32xf32>
    %56 = arith.mulf %55, %54 : vector<16x32xf32>
    %cst_15 = arith.constant dense<0.000000e+00> : vector<2x32xf32>
    %57 = tpu.matmul %27, %56, %cst_15 {dimension_numbers = #tpu.dot_dimension_numbers<[1], [0], [0], [1], [0, 0, 1, 1], [], []>} : vector<2x16xf32>, vector<16x32xf32>, vector<2x32xf32> -> vector<2x32xf32>
    %58 = vector.broadcast %53 : vector<2x1xf32> to vector<2x32xf32>
    %59 = arith.divf %57, %58 : vector<2x32xf32>
    %c0_16 = arith.constant 0 : index
    %c0_17 = arith.constant 0 : index
    %60 = vector.load %arg3[%c0_16, %c0_17] : memref<2x32xf32, #tpu.memory_space<vmem>>, vector<2x32xf32>
    tpu.vector_store %arg3[%c0_16, %c0_17], %59 {strides = array<i32>} : memref<2x32xf32, #tpu.memory_space<vmem>>, vector<2x32xf32>,
    return
  }
}

</mosaic_0001>

<llo_original>
// kernel: tpu_custom_call.1
$region0: #{tpu_custom_call.1}
  #allocation0 [shape = 'u32[]', space=smem, size = 0x4, offset = 0x4, fixed_abs, tag = 'smem constant byte address 0x4 - core index']
  #allocation1 [shape = 'u32[144,128]{1,0:T(1,128)}', space=vmem, size = 0x12000, scoped, tag = 'internal scratch']
  #allocation2 [shape = 'f32[1]{0:T(128)S(6)}', space=smem, size = 0x200, scoped, tag = 'scoped memory for tpu_custom_call.1']
  %s0 = inlined_call_operand.vmem [shape: f32[16,64], index: 0, kind: input, shape index: {}]
  %s1 = inlined_call_operand.vmem [shape: f32[80,32], index: 1, kind: input, shape index: {}]
  %s2 = inlined_call_operand.<no memory space> [shape: f32[1], index: 2, kind: input, shape index: {}]
  %s3 = inlined_call_operand.hbm [shape: f32[2,32], index: 3, kind: output, shape index: {}]
  %s4 = sld [smem:[#allocation0]]
  $region22: #{tpu_custom_call.1} parent=0
    _
  %s6 = ssub.s32 1, %s4
  %s7 = scalar_select 0, %s6, %s4
  %8 = sst [smem:[#allocation2]] %s2
  $region1: #{tpu_custom_call.1} parent=0
    #allocation3 [shape = 'u8[1024]{0}', space=vmem, size = 0x400, scoped, tag = 'output window, operand 0, single buffered']
    #allocation4 [shape = 's32[1]{0}', space=sflag, size = 0x4, scoped, tag = 'scoped memory for tpu_custom_call.1']
    %9 = vsyncpa [#allocation4], 0
    // Predicated region
    $region2: #{tpu_custom_call.1} parent=1 // pred_check
      _
    $region3: #{tpu_custom_call.1} parent=1 // pred_check_branch
      %11 = sbr.rel (0) target = $region5
    $region4: #{tpu_custom_call.1} parent=1 // pred_region
      _
    $region5: #{tpu_custom_call.1} parent=1 // pred_fallthru
      _
    // Predicated region
    $region6: #{tpu_custom_call.1} parent=1 // pred_check
      _
    $region7: #{tpu_custom_call.1} parent=1 // pred_check_branch
      %13 = sbr.rel (0) target = $region9
    $region8: #{tpu_custom_call.1} parent=1 // pred_region
      _
    $region9: #{tpu_custom_call.1} parent=1 // pred_fallthru
      _
    // Predicated region
    $region10: #{tpu_custom_call.1} parent=1 // pred_check
      _
    $region11: #{tpu_custom_call.1} parent=1 // pred_check_branch
      %15 = sbr.rel (0) target = $region13
    $region12: #{tpu_custom_call.1} parent=1 // pred_region
      _
    $region13: #{tpu_custom_call.1} parent=1 // pred_fallthru
      _
    %v16 = vld [vmem:[%s0] sm:$0xff]
    %v17 = vld [vmem:[%s0 + $0x8] sm:$0xff]
    %v18 = vld [vmem:[%s1] sm:$0xff]
    %v19 = vld [vmem:[%s1 + $0x8] sm:$0xff]
    %v20 = vld [vmem:[%s1 + $0x10] sm:$0xff]
    %v21 = vld [vmem:[%s1 + $0x18] sm:$0xff]
    %v22 = vld [vmem:[%s1 + $0x20] sm:$0xff]
    %v23 = vld [vmem:[%s1 + $0x28] sm:$0xff]
    %v24 = vld [vmem:[%s1 + $0x30] sm:$0xff]
    %v25 = vld [vmem:[%s1 + $0x38] sm:$0xff]
    %v26 = vld [vmem:[%s1 + $0x40] sm:$0x1]
    %v27 = vld [vmem:[%s1 + $0x48] sm:$0x1]
    %v28 = vlaneseq
    %v29 = vshrl.u32 %v28, 7
    %v30 = vsub.s32 0, %v29
    %v31 = vrot.slane %v26, %v30
    %vm32 = vcmask 523264
    %v34 = vsel %vm32, %v16, 0
    %v37 = vsel %vm32, %v17, 0
    %39 = vmatprep.subr.mxu0 0.0
    %40 = vmatpush1.msra.mxu0 0.0
    %41 = vmatprep.subr.mxu0 0.0
    %42 = vmatpush1.msra.mxu0 0.0
    %43 = vmatprep.subr.mxu0 0.0
    %44 = vmatpush1.msra.mxu0 0.0
    %45 = vmatprep.subr.mxu0 0.0
    %46 = vmatpush1.msra.mxu0 0.0
    %47 = vmatprep.subr.mxu0 0.0
    %48 = vmatpush1.msra.mxu0 0.0
    %49 = vmatprep.subr.mxu0 0.0
    %50 = vmatpush1.msra.mxu0 0.0
    %51 = vmatprep.subr.mxu0 0.0
    %52 = vmatpush1.msra.mxu0 0.0
    %53 = vmatprep.subr.mxu0 0.0
    %54 = vmatpush1.msra.mxu0 0.0
    %55 = vmatprep.subr.mxu0 0.0
    %56 = vmatpush1.msra.mxu0 %v25
    %57 = vmatprep.subr.mxu0 0.0
    %58 = vmatpush1.msra.mxu0 %v24
    %59 = vmatprep.subr.mxu0 0.0
    %60 = vmatpush1.msra.mxu0 %v23
    %61 = vmatprep.subr.mxu0 0.0
    %62 = vmatpush1.msra.mxu0 %v22
    %63 = vmatprep.subr.mxu0 0.0
    %64 = vmatpush1.msra.mxu0 %v21
    %65 = vmatprep.subr.mxu0 0.0
    %66 = vmatpush1.msra.mxu0 %v20
    %67 = vmatprep.subr.mxu0 0.0
    %68 = vmatpush1.msra.mxu0 %v19
    %69 = vmatprep.subr.mxu0 0.0
    %70 = vmatpush1.msra.mxu0 %v18
    %71 = vmatprep.subr.mxu0 0.0
    %72 = vmatpush2.msra.mxu0 0.0
    %73 = vmatprep.subr.mxu0 0.0
    %74 = vmatpush2.msra.mxu0 0.0
    %75 = vmatprep.subr.mxu0 0.0
    %76 = vmatpush2.msra.mxu0 0.0
    %77 = vmatprep.subr.mxu0 0.0
    %78 = vmatpush2.msra.mxu0 0.0
    %79 = vmatprep.subr.mxu0 0.0
    %80 = vmatpush2.msra.mxu0 0.0
    %81 = vmatprep.subr.mxu0 0.0
    %82 = vmatpush2.msra.mxu0 0.0
    %83 = vmatprep.subr.mxu0 0.0
    %84 = vmatpush2.msra.mxu0 0.0
    %85 = vmatprep.subr.mxu0 0.0
    %86 = vmatpush2.msra.mxu0 0.0
    %87 = vmatprep.subr.mxu0 0.0
    %88 = vmatpush2.msra.mxu0 0.0
    %89 = vmatprep.subr.mxu0 0.0
    %90 = vmatpush2.msra.mxu0 0.0
    %91 = vmatprep.subr.mxu0 0.0
    %92 = vmatpush2.msra.mxu0 0.0
    %93 = vmatprep.subr.mxu0 0.0
    %94 = vmatpush2.msra.mxu0 0.0
    %95 = vmatprep.subr.mxu0 0.0
    %96 = vmatpush2.msra.mxu0 0.0
    %97 = vmatprep.subr.mxu0 0.0
    %98 = vmatpush2.msra.mxu0 0.0
    %99 = vmatprep.subr.mxu0 0.0
    %100 = vmatpush2.msra.mxu0 0.0
    %101 = vmatprep.subr.mxu0 0.0
    %102 = vmatpush2.msra.mxu0 0.0
    %103 = vmatprep.mubr.f32.mxu0 0.0
    %104 = vmatmul.mubr.f32.gmra.mxu0 %v34
    %v105 = vpop.f32.mrf.mxu0
    %v106 = vadd.f32 %v31, %v105
    %v107 = vpop.f32.mrf.mxu0
    %108 = vmatprep.mubr.f32.mxu0 0.0
    %109 = vmatmul.mubr.f32.gmra.mxu0 %v37
    %v110 = vpop.f32.mrf.mxu0
    %v111 = vadd.f32 %v31, %v110
    %v112 = vpop.f32.mrf.mxu0
    %113 = vdwg.mxu0
    %v114 = vtanh.pop %v106
    %v115 = vtanh.pop %v111
    %v116 = vlaneseq
    %v117 = vshrl.u32 %v116, 7
    %v118 = vsub.s32 0, %v117
    %v119 = vrot.slane %v27, %v118
    %v120 = vmul.f32 %v114, %v119
    %v121 = vmul.f32 %v115, %v119
    %vm122 = vcmask 261120
    %v123 = vsel %vm122, %v120, 0.0
    %124 = vadd.xlane.f32.xlu0 %v123
    %v125 = vpop.xlane.xlu0 %124
    %v126 = vsel %vm122, %v121, 0.0
    %127 = vadd.xlane.f32.xlu0 %v126
    %v128 = vpop.xlane.xlu0 %127
    %s129 = sld [smem:[#allocation2]]
    %v130 = vstv %s129
    %v131 = vadd.f32 %v125, %v130
    %v132 = vadd.f32 %v128, %v130
    %v133 = vlaneseq
    %v134 = vshrl.u32 %v133, 7
    %v135 = vlaneseq
    %v136 = vand.u32 %v135, 127
    %v137 = vmul.u32 %v134, 8
    %vm138 = vcmp.ge.s32.totalorder %v136, %v137
    %v139 = vadd.s32 %v134, 1
    %v140 = vmul.u32 %v139, 8
    %vm141 = vcmp.lt.s32.totalorder %v136, %v140
    %vm142 = vmand %vm138, %vm141
    %v143 = vsel %vm142, 1, 0
    %v144 = vcvt.s32.f32 %v143
    %v145 = vadd.s32 %v134, 8
    %v146 = vmul.u32 %v136, 8
    %vm147 = vcmp.ge.s32.totalorder %v134, %v146
    %vm148 = vcmp.ge.s32.totalorder %v145, %v146
    %v149 = vadd.s32 %v136, 1
    %v150 = vmul.u32 %v149, 8
    %vm151 = vcmp.lt.s32.totalorder %v134, %v150
    %vm152 = vcmp.lt.s32.totalorder %v145, %v150
    %vm153 = vmand %vm147, %vm151
    %vm154 = vmand %vm148, %vm152
    %v155 = vsel %vm153, 1, 0
    %v156 = vsel %vm154, 1, 0
    %v157 = vcvt.s32.f32 %v155
    %v158 = vcvt.s32.f32 %v156
    %v159 = vsel %vm153, %v131, -1e+30
    %v160 = vsel %vm154, %v132, -1e+30
    %vm161 = vcmask 15360
    %v162 = vsel %vm161, %v159, -inf
    %v163 = vsel %vm161, %v160, -inf
    %v164 = vmax.f32 %v162, %v163
    %v165 = vrot.slane %v164, 4
    %v166 = vmax.f32 %v164, %v165
    %v167 = vrot.slane %v166, 2
    %v168 = vmax.f32 %v166, %v167
    %v169 = vrot.slane %v168, 1
    %v170 = vmax.f32 %v168, %v169
    %v171 = vmul.f32 %v157, %v170
    %v172 = vmul.f32 %v158, %v170
    %v173 = vsel %vm161, %v171, 0.0
    %174 = vadd.xlane.f32.xlu0 %v173
    %v175 = vpop.xlane.xlu0 %174
    %v176 = vsel %vm161, %v172, 0.0
    %177 = vadd.xlane.f32.xlu0 %v176
    %v178 = vpop.xlane.xlu0 %177
    %v179 = vsub.f32 %v131, %v175
    %v180 = vsub.f32 %v132, %v178
    %v181 = vmul.f32 %v179, 1.442695
    %v182 = vpow.pop %v181
    %v183 = vmul.f32 %v180, 1.442695
    %v184 = vpow.pop %v183
    %vm185 = vcmask 130048
    %v187 = vsel %vm185, %v144, 0
    %189 = vmatprep.subr.mxu0 0.0
    %190 = vmatpush1.msra.mxu0 0.0
    %191 = vmatprep.subr.mxu0 0.0
    %192 = vmatpush1.msra.mxu0 0.0
    %193 = vmatprep.subr.mxu0 0.0
    %194 = vmatpush1.msra.mxu0 0.0
    %195 = vmatprep.subr.mxu0 0.0
    %196 = vmatpush1.msra.mxu0 0.0
    %197 = vmatprep.subr.mxu0 0.0
    %198 = vmatpush1.msra.mxu0 0.0
    %199 = vmatprep.subr.mxu0 0.0
    %200 = vmatpush1.msra.mxu0 0.0
    %201 = vmatprep.subr.mxu0 0.0
    %202 = vmatpush1.msra.mxu0 0.0
    %203 = vmatprep.subr.mxu0 0.0
    %204 = vmatpush1.msra.mxu0 0.0
    %205 = vmatprep.subr.mxu0 0.0
    %206 = vmatpush1.msra.mxu0 0.0
    %207 = vmatprep.subr.mxu0 0.0
    %208 = vmatpush1.msra.mxu0 0.0
    %209 = vmatprep.subr.mxu0 0.0
    %210 = vmatpush1.msra.mxu0 0.0
    %211 = vmatprep.subr.mxu0 0.0
    %212 = vmatpush1.msra.mxu0 0.0
    %213 = vmatprep.subr.mxu0 0.0
    %214 = vmatpush1.msra.mxu0 0.0
    %215 = vmatprep.subr.mxu0 0.0
    %216 = vmatpush1.msra.mxu0 0.0
    %217 = vmatprep.subr.mxu0 0.0
    %218 = vmatpush1.msra.mxu0 %v184
    %219 = vmatprep.subr.mxu0 0.0
    %220 = vmatpush1.msra.mxu0 %v182
    %221 = vmatprep.subr.mxu0 0.0
    %222 = vmatpush2.msra.mxu0 0.0
    %223 = vmatprep.subr.mxu0 0.0
    %224 = vmatpush2.msra.mxu0 0.0
    %225 = vmatprep.subr.mxu0 0.0
    %226 = vmatpush2.msra.mxu0 0.0
    %227 = vmatprep.subr.mxu0 0.0
    %228 = vmatpush2.msra.mxu0 0.0
    %229 = vmatprep.subr.mxu0 0.0
    %230 = vmatpush2.msra.mxu0 0.0
    %231 = vmatprep.subr.mxu0 0.0
    %232 = vmatpush2.msra.mxu0 0.0
    %233 = vmatprep.subr.mxu0 0.0
    %234 = vmatpush2.msra.mxu0 0.0
    %235 = vmatprep.subr.mxu0 0.0
    %236 = vmatpush2.msra.mxu0 0.0
    %237 = vmatprep.subr.mxu0 0.0
    %238 = vmatpush2.msra.mxu0 0.0
    %239 = vmatprep.subr.mxu0 0.0
    %240 = vmatpush2.msra.mxu0 0.0
    %241 = vmatprep.subr.mxu0 0.0
    %242 = vmatpush2.msra.mxu0 0.0
    %243 = vmatprep.subr.mxu0 0.0
    %244 = vmatpush2.msra.mxu0 0.0
    %245 = vmatprep.subr.mxu0 0.0
    %246 = vmatpush2.msra.mxu0 0.0
    %247 = vmatprep.subr.mxu0 0.0
    %248 = vmatpush2.msra.mxu0 0.0
    %249 = vmatprep.subr.mxu0 0.0
    %250 = vmatpush2.msra.mxu0 0.0
    %251 = vmatprep.subr.mxu0 0.0
    %252 = vmatpush2.msra.mxu0 0.0
    %253 = vmatprep.mubr.f32.mxu0 0.0
    %254 = vmatmul.mubr.f32.gmra.mxu0 %v187
    %v255 = vpop.f32.mrf.mxu0
    %v256 = vadd.f32 0.0, %v255
    %v257 = vpop.f32.mrf.mxu0
    %258 = vdwg.mxu0
    %v259 = vmul.f32 %v182, %v16
    %v260 = vmul.f32 %v184, %v17
    %261 = vmatprep.subr.mxu0 0.0
    %262 = vmatpush1.msra.mxu0 0.0
    %263 = vmatprep.subr.mxu0 0.0
    %264 = vmatpush1.msra.mxu0 0.0
    %265 = vmatprep.subr.mxu0 0.0
    %266 = vmatpush1.msra.mxu0 0.0
    %267 = vmatprep.subr.mxu0 0.0
    %268 = vmatpush1.msra.mxu0 0.0
    %269 = vmatprep.subr.mxu0 0.0
    %270 = vmatpush1.msra.mxu0 0.0
    %271 = vmatprep.subr.mxu0 0.0
    %272 = vmatpush1.msra.mxu0 0.0
    %273 = vmatprep.subr.mxu0 0.0
    %274 = vmatpush1.msra.mxu0 0.0
    %275 = vmatprep.subr.mxu0 0.0
    %276 = vmatpush1.msra.mxu0 0.0
    %277 = vmatprep.subr.mxu0 0.0
    %278 = vmatpush1.msra.mxu0 0.0
    %279 = vmatprep.subr.mxu0 0.0
    %280 = vmatpush1.msra.mxu0 0.0
    %281 = vmatprep.subr.mxu0 0.0
    %282 = vmatpush1.msra.mxu0 0.0
    %283 = vmatprep.subr.mxu0 0.0
    %284 = vmatpush1.msra.mxu0 0.0
    %285 = vmatprep.subr.mxu0 0.0
    %286 = vmatpush1.msra.mxu0 0.0
    %287 = vmatprep.subr.mxu0 0.0
    %288 = vmatpush1.msra.mxu0 0.0
    %289 = vmatprep.subr.mxu0 0.0
    %290 = vmatpush1.msra.mxu0 %v260
    %291 = vmatprep.subr.mxu0 0.0
    %292 = vmatpush1.msra.mxu0 %v259
    %293 = vmatprep.subr.mxu0 0.0
    %294 = vmatpush2.msra.mxu0 0.0
    %295 = vmatprep.subr.mxu0 0.0
    %296 = vmatpush2.msra.mxu0 0.0
    %297 = vmatprep.subr.mxu0 0.0
    %298 = vmatpush2.msra.mxu0 0.0
    %299 = vmatprep.subr.mxu0 0.0
    %300 = vmatpush2.msra.mxu0 0.0
    %301 = vmatprep.subr.mxu0 0.0
    %302 = vmatpush2.msra.mxu0 0.0
    %303 = vmatprep.subr.mxu0 0.0
    %304 = vmatpush2.msra.mxu0 0.0
    %305 = vmatprep.subr.mxu0 0.0
    %306 = vmatpush2.msra.mxu0 0.0
    %307 = vmatprep.subr.mxu0 0.0
    %308 = vmatpush2.msra.mxu0 0.0
    %309 = vmatprep.subr.mxu0 0.0
    %310 = vmatpush2.msra.mxu0 0.0
    %311 = vmatprep.subr.mxu0 0.0
    %312 = vmatpush2.msra.mxu0 0.0
    %313 = vmatprep.subr.mxu0 0.0
    %314 = vmatpush2.msra.mxu0 0.0
    %315 = vmatprep.subr.mxu0 0.0
    %316 = vmatpush2.msra.mxu0 0.0
    %317 = vmatprep.subr.mxu0 0.0
    %318 = vmatpush2.msra.mxu0 0.0
    %319 = vmatprep.subr.mxu0 0.0
    %320 = vmatpush2.msra.mxu0 0.0
    %321 = vmatprep.subr.mxu0 0.0
    %322 = vmatpush2.msra.mxu0 0.0
    %323 = vmatprep.subr.mxu0 0.0
    %324 = vmatpush2.msra.mxu0 0.0
    %325 = vmatprep.mubr.f32.mxu0 0.0
    %326 = vmatmul.mubr.f32.gmra.mxu0 %v187
    %v327 = vpop.f32.mrf.mxu0
    %v328 = vadd.f32 0.0, %v327
    %v329 = vpop.f32.mrf.mxu0
    %330 = vdwg.mxu0
    %332 = vset.pattern.permute.xlu0 0
    %333 = vperm.xlu0 %332, %v256
    %v334 = vpop.permute.xlu0 %333
    %v336 = vrcp.pop %v334
    %v337 = vmul.f32 %v328, %v336
    %vm338 = vcmask 254976
    %339 = vst.msk [vmem:[#allocation3] sm:$0x3] %vm338, %v337
    // Predicated region
    $region14: #{tpu_custom_call.1} parent=1 // pred_check
      _
    $region15: #{tpu_custom_call.1} parent=1 // pred_check_branch
      %341 = sbr.rel (0) target = $region17
    $region16: #{tpu_custom_call.1} parent=1 // pred_region
      %s343 = ssub.s32 32, 32
      %344 = vsyncadd [#allocation4], %s343
      %s346 = sshll.u32 [#allocation3], 4
      %s347 = int_to_ptr.vmem [resolvable:$true] %s346
      %349 = dma.vmem_to_hbm [thread:$0]  %s347, 32, %s3, [#allocation4]
    $region17: #{tpu_custom_call.1} parent=1 // pred_fallthru
      _
    // Predicated region
    $region18: #{tpu_custom_call.1} parent=1 // pred_check
      _
    $region19: #{tpu_custom_call.1} parent=1 // pred_check_branch
      %351 = sbr.rel (0) target = $region21
    $region20: #{tpu_custom_call.1} parent=1 // pred_region
      %352 = dma.done [#allocation4], 32
    $region21: #{tpu_custom_call.1} parent=1 // pred_fallthru
      _
    %353 = vsyncpa [#allocation4], 1

</llo_original>
